<compile_context>
chip_gen: v6e
topology: v6e:2x2x1
jax: 0.10.0
libtpu: 0.0.40
codegen_flags: <defaults>
</compile_context>

<pallas_src>
import functools

import numpy as np
import jax
import jax.numpy as jnp
from jax.experimental import pallas as pl
from jax.experimental.pallas import tpu as pltpu


# ----------------------------------------------------------------------------
# Parameter setup (mirrors anchorBox.__init__ / _gen_generate_anchors_on_one_level)
# ----------------------------------------------------------------------------
SIZES = [32, 64, 128, 256, 512]
RATIOS = np.asarray([0.5, 1.0, 2.0])
STRIDES = [8, 16, 32, 64, 128]
SCALES = np.asarray([1.0, 1.25992, 1.5874])


def _generate_anchors_on_one_level(base_size):
    num_anchors = len(RATIOS) * len(SCALES)
    anchors = np.zeros((num_anchors, 4))
    anchors[:, 2:] = base_size * np.tile(SCALES, (2, len(RATIOS))).T
    areas = anchors[:, 2] * anchors[:, 3]
    anchors[:, 2] = np.sqrt(areas / np.repeat(RATIOS, len(SCALES)))
    anchors[:, 3] = anchors[:, 2] * np.repeat(RATIOS, len(SCALES))
    anchors[:, 0::2] -= np.tile(anchors[:, 2] * 0.5, (2, 1)).T
    anchors[:, 1::2] -= np.tile(anchors[:, 3] * 0.5, (2, 1)).T
    return anchors.astype(np.float32)


CELL_ANCHORS = [_generate_anchors_on_one_level(s) for s in SIZES]  # each (9, 4)
NUM_ANCHORS = CELL_ANCHORS[0].shape[0]   # A = 9
COLS = NUM_ANCHORS * 4                   # 36 anchor coords per grid cell

MAX_TILE_CELLS = 1024                    # lane-axis tile width (multiple of 128)


def _round_up(x, m):
    return ((x + m - 1) // m) * m


# ----------------------------------------------------------------------------
# Kernel: one tile of TILE_C grid cells, transposed (lane-dense) layout.
#   lvl_ref  : SMEM (num_tiles,) int32   -- consumed only by index_maps
#   shift_ref: VMEM (2, TILE_C)          -- row 0 = shift_x, row 1 = shift_y
#   base_ref : VMEM (36, 1)              -- this tile's level base anchors
#   out_ref  : VMEM (36, TILE_C)
# ----------------------------------------------------------------------------
def _anchor_tile_kernel(lvl_ref, shift_ref, base_ref, out_ref):
    del lvl_ref  # level selection is done in the base-anchor index_map
    sx = shift_ref[0:1, :]                                        # (1, TILE_C)
    sy = shift_ref[1:2, :]                                        # (1, TILE_C)
    # Row parity selects x vs y ([x1,y1,x2,y2] * 9 along the sublane axis).
    r = jax.lax.broadcasted_iota(jnp.int32, out_ref.shape, 0)     # (36, TILE_C)
    is_x = (r % 2) == 0
    # One select + one add per output vreg; implicit (1,C)/(36,1) broadcasts.
    out_ref[...] = jnp.where(is_x, sx, sy) + base_ref[...]


# ----------------------------------------------------------------------------
# Trace-time numpy constants: transposed shifts, base table, per-tile level ids
# ----------------------------------------------------------------------------
def _build_constants(grid_sizes):
    level_rows, shift_cols = [], []
    for (gh, gw), stride in zip(grid_sizes, STRIDES):
        gh, gw = int(gh), int(gw)
        xs = (np.tile(np.arange(gw, dtype=np.float32), gh) + 0.5) * np.float32(stride)
        ys = (np.repeat(np.arange(gh, dtype=np.float32), gw) + 0.5) * np.float32(stride)
        shift_cols.append(np.stack([xs, ys], axis=0))             # (2, gh*gw)
        level_rows.append(gh * gw)

    tile_c = min(MAX_TILE_CELLS, max(128, _round_up(max(level_rows), 128)))

    padded_shifts, lvl_ids, level_offsets = [], [], []
    off = 0
    for lvl, (sc, rows) in enumerate(zip(shift_cols, level_rows)):
        n_tiles = _round_up(rows, tile_c) // tile_c
        padded = n_tiles * tile_c
        buf = np.zeros((2, padded), np.float32)
        buf[:, :rows] = sc
        padded_shifts.append(buf)
        lvl_ids.extend([lvl] * n_tiles)
        level_offsets.append(off)
        off += padded

    shifts = np.concatenate(padded_shifts, axis=1)                # (2, total_padded)
    bases = np.stack([b.reshape(COLS, 1) for b in CELL_ANCHORS], axis=0)  # (5, 36, 1)
    lvl_ids = np.asarray(lvl_ids, dtype=np.int32)                 # (num_tiles,)
    return (shifts, bases.astype(np.float32), lvl_ids, tile_c,
            tuple(level_rows), tuple(level_offsets))


# NOTE: lru_cache pins the resulting device arrays for the process lifetime;
# fine for a single-device anchor table, re-evaluate for multi-device jobs.
@functools.lru_cache(maxsize=None)
def anchor_box_forward(grid_sizes):
    """grid_sizes: tuple of (grid_height, grid_width) python ints, one per level.
    Returns (sum_hw * 9, 4) float32 anchors — same as anchorBox.forward."""
    grid_sizes = tuple((int(h), int(w)) for h, w in grid_sizes)
    (shifts_np, bases_np, lvl_ids_np, tile_c,
     level_rows, level_offsets) = _build_constants(grid_sizes)
    total_padded = int(shifts_np.shape[1])
    num_tiles = int(lvl_ids_np.shape[0])
    sum_hw = int(sum(level_rows))

    out_t = pl.pallas_call(
        _anchor_tile_kernel,
        out_shape=jax.ShapeDtypeStruct((COLS, total_padded), jnp.float32),
        grid_spec=pltpu.PrefetchScalarGridSpec(
            num_scalar_prefetch=1,
            grid=(num_tiles,),
            in_specs=[
                # shifts: (2, tile_c) column tile per grid step
                pl.BlockSpec((2, tile_c), lambda i, lvl: (0, i)),
                # base anchors: (36, 1) column for this tile's level
                pl.BlockSpec((None, COLS, 1), lambda i, lvl: (lvl[i], 0, 0)),
            ],
            out_specs=pl.BlockSpec((COLS, tile_c), lambda i, lvl: (0, i)),
        ),
        compiler_params=pltpu.CompilerParams(
            dimension_semantics=("parallel",)),
    )(jnp.asarray(lvl_ids_np), jnp.asarray(shifts_np), jnp.asarray(bases_np))

    # Strip per-level pad columns, undo the transpose, restore torch row order.
    parts = [out_t[:, off:off + rows]
             for off, rows in zip(level_offsets, level_rows)]
    full_t = parts[0] if len(parts) == 1 else jnp.concatenate(parts, axis=1)
    return full_t.T.reshape(sum_hw * NUM_ANCHORS, 4)


# ----------------------------------------------------------------------------
# Pure-numpy reference (faithful port of the torch forward) for verification
# ----------------------------------------------------------------------------
def _reference(grid_sizes):
    outs = []
    for (gh, gw), stride, base in zip(grid_sizes, STRIDES, CELL_ANCHORS):
        sx = np.arange(0, gw, dtype=np.float32)
        sy = np.arange(0, gh, dtype=np.float32)
        shift_y, shift_x = np.meshgrid(sy, sx, indexing="ij")
        shift_x = (shift_x.reshape(-1) + 0.5) * stride
        shift_y = (shift_y.reshape(-1) + 0.5) * stride
        shifts = np.stack((shift_x, shift_y, shift_x, shift_y), axis=1)
        outs.append((shifts.reshape(-1, 1, 4) + base.reshape(1, -1, 4)).reshape(-1, 4))
    return np.concatenate(outs, axis=0).astype(np.float32)


if __name__ == "__main__":
    _ = jax.random.PRNGKey(0)  # inputs are structural (static grid sizes); key unused
    # Feature-pyramid grid sizes for a small 128x128-style input (strides 8..128)
    grid_sizes = ((16, 16), (8, 8), (4, 4), (2, 2), (1, 1))

    anchors = anchor_box_forward(grid_sizes)
    anchors = jax.block_until_ready(anchors)

    ref = _reference(grid_sizes)
    assert anchors.shape == ref.shape, (anchors.shape, ref.shape)
    np.testing.assert_allclose(np.asarray(anchors), ref, rtol=1e-6, atol=1e-4)
    print("KERNEL_OK")
</pallas_src>

<mosaic_0001>
module attributes {stable_mosaic.version = 11 : i64} {
  func.func @_anchor_tile_kernel(%arg0: i32, %arg1: memref<5xi32, #tpu.memory_space<smem>>, %arg2: memref<2x256xf32, #tpu.memory_space<vmem>>, %arg3: memref<1x36x1xf32, #tpu.memory_space<vmem>>, %arg4: memref<36x256xf32, #tpu.memory_space<vmem>>) attributes {dimension_semantics = [#tpu.dimension_semantics<parallel>], iteration_bounds = array<i64: 5>, scalar_prefetch = 1 : i64, scratch_operands = 0 : i64, tpu.core_type = #tpu.core_type<tc>, window_params = [{transform_indices = @transform_0, window_bounds = array<i64: 2, 256>}, {transform_indices = @transform_1, window_bounds = array<i64: 1, 36, 1>}, {transform_indices = @transform_2, window_bounds = array<i64: 36, 256>}]} {
    %c0 = arith.constant 0 : index
    %c0_0 = arith.constant 0 : index
    %0 = vector.load %arg2[%c0, %c0_0] : memref<2x256xf32, #tpu.memory_space<vmem>>, vector<1x256xf32>
    %c1 = arith.constant 1 : index
    %c0_1 = arith.constant 0 : index
    %1 = vector.load %arg2[%c1, %c0_1] : memref<2x256xf32, #tpu.memory_space<vmem>>, vector<1x256xf32>
    %2 = tpu.iota {dimensions = array<i32: 0>} : vector<36x256xi32>
    %c2_i32 = arith.constant 2 : i32
    %c0_i32 = arith.constant 0 : i32
    %3 = arith.cmpi eq, %c2_i32, %c0_i32 : i32
    %c1_i32 = arith.constant 1 : i32
    %4 = arith.select %3, %c1_i32, %c2_i32 : i32
    %5 = vector.broadcast %4 : i32 to vector<36x256xi32>
    %6 = arith.remsi %2, %5 : vector<36x256xi32>
    %c0_i32_2 = arith.constant 0 : i32
    %7 = vector.broadcast %c0_i32_2 : i32 to vector<36x256xi32>
    %8 = arith.cmpi ne, %6, %7 : vector<36x256xi32>
    %c0_i32_3 = arith.constant 0 : i32
    %9 = vector.broadcast %c0_i32_3 : i32 to vector<36x256xi32>
    %10 = arith.cmpi slt, %6, %9 : vector<36x256xi32>
    %c0_i32_4 = arith.constant 0 : i32
    %11 = arith.cmpi slt, %4, %c0_i32_4 : i32
    %12 = vector.broadcast %11 : i1 to vector<36x256xi1>
    %13 = vector.broadcast %12 : vector<36x256xi1> to vector<36x256xi1>
    %14 = arith.xori %10, %13 : vector<36x256xi1>
    %15 = arith.andi %14, %8 : vector<36x256xi1>
    %16 = vector.broadcast %4 : i32 to vector<36x256xi32>
    %17 = arith.addi %6, %16 : vector<36x256xi32>
    %18 = arith.select %15, %17, %6 : vector<36x256xi1>, vector<36x256xi32>
    %c0_i32_5 = arith.constant 0 : i32
    %19 = vector.broadcast %c0_i32_5 : i32 to vector<36x256xi32>
    %20 = arith.cmpi eq, %18, %19 : vector<36x256xi32>
    %21 = vector.shape_cast %0 : vector<1x256xf32> to vector<1x256xf32>
    %22 = vector.broadcast %21 : vector<1x256xf32> to vector<36x256xf32>
    %23 = vector.shape_cast %1 : vector<1x256xf32> to vector<1x256xf32>
    %24 = vector.broadcast %23 : vector<1x256xf32> to vector<36x256xf32>
    %25 = arith.select %20, %22, %24 : vector<36x256xi1>, vector<36x256xf32>
    %c0_6 = arith.constant 0 : index
    %c0_7 = arith.constant 0 : index
    %c0_8 = arith.constant 0 : index
    %26 = vector.load %arg3[%c0_6, %c0_7, %c0_8] : memref<1x36x1xf32, #tpu.memory_space<vmem>>, vector<1x36x1xf32>
    %27 = vector.shape_cast %26 : vector<1x36x1xf32> to vector<36x1xf32>
    %28 = vector.broadcast %27 : vector<36x1xf32> to vector<36x256xf32>
    %29 = arith.addf %25, %28 : vector<36x256xf32>
    %c0_9 = arith.constant 0 : index
    %c0_10 = arith.constant 0 : index
    %30 = vector.load %arg4[%c0_9, %c0_10] : memref<36x256xf32, #tpu.memory_space<vmem>>, vector<36x256xf32>
    tpu.vector_store %arg4[%c0_9, %c0_10], %29 {strides = array<i32>} : memref<36x256xf32, #tpu.memory_space<vmem>>, vector<36x256xf32>,
    return
  }
  func.func @transform_0(%arg0: i32, %arg1: memref<5xi32, #tpu.memory_space<smem>>) -> (i32, i32) {
    %c0_i32 = arith.constant 0 : i32
    %c0_i32_0 = arith.constant 0 : i32
    return %c0_i32, %arg0 : i32, i32
  }
  func.func @transform_1(%arg0: i32, %arg1: memref<5xi32, #tpu.memory_space<smem>>) -> (i32, i32, i32) {
    %0 = arith.index_cast %arg0 : i32 to index
    %1 = memref.load %arg1[%0] : memref<5xi32, #tpu.memory_space<smem>>
    %c0_i32 = arith.constant 0 : i32
    %c0_i32_0 = arith.constant 0 : i32
    %c0_i32_1 = arith.constant 0 : i32
    return %1, %c0_i32, %c0_i32_0 : i32, i32, i32
  }
  func.func @transform_2(%arg0: i32, %arg1: memref<5xi32, #tpu.memory_space<smem>>) -> (i32, i32) {
    %c0_i32 = arith.constant 0 : i32
    %c0_i32_0 = arith.constant 0 : i32
    return %c0_i32, %arg0 : i32, i32
  }
}

</mosaic_0001>

<llo_original>
// kernel: tpu_custom_call.1
$region0: #{tpu_custom_call.1}
  #allocation0 [shape = 'u32[]', space=smem, size = 0x4, offset = 0x4, fixed_abs, tag = 'smem constant byte address 0x4 - core index']
  #allocation1 [shape = 'u32[144,128]{1,0:T(1,128)}', space=vmem, size = 0x12000, scoped, tag = 'internal scratch']
  #allocation2 [shape = 's32[1]{0}', space=sflag, size = 0x4, scoped, tag = 'scoped memory for tpu_custom_call.1']
  #allocation3 [shape = 'u8[512]{0}', space=smem, size = 0x200, scoped, tag = 'prefetched SMEM operand 0']
  %s0 = inlined_call_operand.vmem [shape: s32[5], index: 0, kind: input, shape index: {}]
  %s1 = inlined_call_operand.vmem [shape: f32[2,1280], index: 1, kind: input, shape index: {}]
  %s2 = inlined_call_operand.vmem [shape: f32[5,36,1], index: 2, kind: input, shape index: {}]
  %s3 = inlined_call_operand.hbm [shape: f32[36,1280], index: 3, kind: output, shape index: {}]
  %s4 = sld [smem:[#allocation0]]
  $region41: #{tpu_custom_call.1} parent=0
    _
  %s6 = ssub.s32 1, %s4
  %s7 = scalar_select 0, %s6, %s4
  %s8 = sshll.u32 %s0, 4
  %s9 = int_to_ptr.vmem [resolvable:$true] %s8
  %11 = dma.vmem_to_smem %s9, 16, [#allocation3], [#allocation2]
  %12 = dma.done [#allocation2], 16
  %13 = sfence
  $region1: #{tpu_custom_call.1} parent=0
    #allocation4 [shape = 'u8[81920]{0}', space=vmem, size = 0x14000, scoped, tag = 'output window, operand 0']
    #allocation5 [shape = 's32[2]{0}', space=sflag, size = 0x8, scoped, tag = 'scoped memory for tpu_custom_call.1']
    %14 = vsyncpa [#allocation5], 0
    %s15 = scalar_lea.sflag [#allocation5], 1
    %16 = vsyncpa %s15, 0
    loop: start=0, step=1, limit=7
    $region2: #{tpu_custom_call.1} parent=1 // loop_pre_header
      _
    $region3: #{tpu_custom_call.1} parent=1 // loop_header
      %s18 = sphi 0, %s22
      %p19 = scmp.ge.s32.totalorder %s18, 7
      %s28 = sphi 0, %s30
      %s31 = sphi 0, %s28
      %s32 = sphi 0, %s31
      %s48 = sphi 0, %s32
      %s56 = sphi 0, %s58
      %s59 = sphi 0, %s56
      %s60 = sphi 0, %s59
      %s76 = sphi 0, %s60
      %s82 = sphi 0, %s84
      %s85 = sphi 0, %s82
      %s86 = sphi 0, %s85
      %s102 = sphi 0, %s86
    $region4: #{tpu_custom_call.1} parent=1 // loop_header_branch
      %21 = sbr.rel (%p19) target = $region8
    $region5: #{tpu_custom_call.1} parent=1 // loop_body
      %s23 = ssub.s32 %s18, 1
      %s24 = ssub.s32 %s18, 2
      %s25 = sadd.s32 %s18, 1
      %s26 = ssub.s32 %s18, %s25
      %p27 = scmp.eq.s32.totalorder %s26, 0
      %s29 = sadd.s32 %s28, 1
      %s30 = scalar_select %p27, %s28, %s29
      %p33 = pneg %p27
      %p34 = scmp.eq.s32.totalorder %s18, 4
      %p35 = por %p33, %p34
      %p36 = scmp.ne.s32.totalorder %s28, %s31
      %p37 = scmp.eq.s32.totalorder %s18, 0
      %p38 = por %p36, %p37
      %p39 = scmp.ne.s32.totalorder %s28, %s31
      %p40 = scmp.eq.s32.totalorder %s23, 4
      %p41 = por %p39, %p40
      %p42 = scmp.ne.s32.totalorder %s31, %s32
      %p43 = scmp.eq.s32.totalorder %s23, 0
      %p44 = por %p42, %p43
      %p45 = scmp.ne.s32.totalorder %s31, %s32
      %p46 = scmp.eq.s32.totalorder %s24, 4
      %p47 = por %p45, %p46
      %p49 = scmp.ne.s32.totalorder %s32, %s48
      %p50 = scmp.eq.s32.totalorder %s24, 0
      %p51 = por %p49, %p50
      %s52 = sld [smem:[#allocation3 + %s18]]
      %s53 = sld [smem:[#allocation3 + %s25]]
      %s54 = ssub.s32 %s52, %s53
      %p55 = scmp.eq.s32.totalorder %s54, 0
      %s57 = sadd.s32 %s56, 1
      %s58 = scalar_select %p55, %s56, %s57
      %p61 = pneg %p55
      %p62 = scmp.eq.s32.totalorder %s18, 4
      %p63 = por %p61, %p62
      %p64 = scmp.ne.s32.totalorder %s56, %s59
      %p65 = scmp.eq.s32.totalorder %s18, 0
      %p66 = por %p64, %p65
      %p67 = scmp.ne.s32.totalorder %s56, %s59
      %p68 = scmp.eq.s32.totalorder %s23, 4
      %p69 = por %p67, %p68
      %p70 = scmp.ne.s32.totalorder %s59, %s60
      %p71 = scmp.eq.s32.totalorder %s23, 0
      %p72 = por %p70, %p71
      %p73 = scmp.ne.s32.totalorder %s59, %s60
      %p74 = scmp.eq.s32.totalorder %s24, 4
      %p75 = por %p73, %p74
      %p77 = scmp.ne.s32.totalorder %s60, %s76
      %p78 = scmp.eq.s32.totalorder %s24, 0
      %p79 = por %p77, %p78
      %s80 = ssub.s32 %s18, %s25
      %p81 = scmp.eq.s32.totalorder %s80, 0
      %s83 = sadd.s32 %s82, 1
      %s84 = scalar_select %p81, %s82, %s83
      %p87 = pneg %p81
      %p88 = scmp.eq.s32.totalorder %s18, 4
      %p89 = por %p87, %p88
      %p90 = scmp.ne.s32.totalorder %s82, %s85
      %p91 = scmp.eq.s32.totalorder %s18, 0
      %p92 = por %p90, %p91
      %p93 = scmp.ne.s32.totalorder %s82, %s85
      %p94 = scmp.eq.s32.totalorder %s23, 4
      %p95 = por %p93, %p94
      %p96 = scmp.ne.s32.totalorder %s85, %s86
      %p97 = scmp.eq.s32.totalorder %s23, 0
      %p98 = por %p96, %p97
      %p99 = scmp.ne.s32.totalorder %s85, %s86
      %p100 = scmp.eq.s32.totalorder %s24, 4
      %p101 = por %p99, %p100
      %p103 = scmp.ne.s32.totalorder %s86, %s102
      %p104 = scmp.eq.s32.totalorder %s24, 0
      %p105 = por %p103, %p104
      %p106 = scmp.le.s32.totalorder 1, %s18
      %p107 = scmp.lt.s32.totalorder %s18, 6
      %p108 = pnand %p106, %p107
      %p109 = pneg %p108
      // Predicated region
      $region9: #{tpu_custom_call.1} parent=5 // pred_check
        _
      $region10: #{tpu_custom_call.1} parent=5 // pred_check_branch
        %111 = sbr.rel (%p108) target = $region12
      $region11: #{tpu_custom_call.1} parent=5 // pred_region
        %s112 = ssub.s32 %s18, 1
      $region12: #{tpu_custom_call.1} parent=5 // pred_fallthru
        _
      %p113 = scmp.lt.s32.totalorder %s18, 5
      // Predicated region
      $region13: #{tpu_custom_call.1} parent=5 // pred_check
        %p114 = pneg %p113
      $region14: #{tpu_custom_call.1} parent=5 // pred_check_branch
        %116 = sbr.rel (%p114) target = $region16
      $region15: #{tpu_custom_call.1} parent=5 // pred_region
        // Predicated region
        $region17: #{tpu_custom_call.1} parent=15 // pred_check
          %p117 = pneg %p38
        $region18: #{tpu_custom_call.1} parent=15 // pred_check_branch
          %119 = sbr.rel (%p117) target = $region20
        $region19: #{tpu_custom_call.1} parent=15 // pred_region
          %s120 = smul.u32 2, %s18
          %p121 = scmp.lt.s32.totalorder %s120, 9
          %s122 = scalar_select %p121, %s120, 9
          %s123 = smul.addr %s122, 2
          %s124 = scalar_lea.vmem %s1, %s123
          %s125 = smul.u32 2, %s18
        $region20: #{tpu_custom_call.1} parent=15 // pred_fallthru
          _
        // Predicated region
        $region21: #{tpu_custom_call.1} parent=15 // pred_check
          %p126 = pneg %p66
        $region22: #{tpu_custom_call.1} parent=15 // pred_check_branch
          %128 = sbr.rel (%p126) target = $region24
        $region23: #{tpu_custom_call.1} parent=15 // pred_region
          %s129 = sld [smem:[#allocation3 + %s18]]
          %p130 = scmp.lt.s32.totalorder %s129, 4
          %s131 = scalar_select %p130, %s129, 4
          %s132 = smul.addr %s131, 5
          %s133 = smul.addr %s132, 8
          %s134 = scalar_lea.vmem %s2, %s133
          %s135 = sld [smem:[#allocation3 + %s18]]
        $region24: #{tpu_custom_call.1} parent=15 // pred_fallthru
          _
      $region16: #{tpu_custom_call.1} parent=5 // pred_fallthru
        _
      %p136 = scmp.le.s32.totalorder 1, %s18
      %p137 = scmp.lt.s32.totalorder %s18, 6
      %p138 = pnand %p136, %p137
      %p139 = pneg %p138
      // Predicated region
      $region25: #{tpu_custom_call.1} parent=5 // pred_check
        _
      $region26: #{tpu_custom_call.1} parent=5 // pred_check_branch
        %141 = sbr.rel (%p138) target = $region28
      $region27: #{tpu_custom_call.1} parent=5 // pred_region
        %s142 = ssub.s32 %s18, 1
        %s143 = smul.u32 2, %s23
        %p144 = scmp.lt.s32.totalorder %s143, 9
        %s145 = scalar_select %p144, %s143, 9
        %s146 = smul.addr %s145, 2
        %s147 = scalar_lea.vmem %s1, %s146
        %p148 = pneg %p44
        %p149 = pneg %p41
        %s150 = sld [smem:[#allocation3 + %s23]]
        %p151 = scmp.lt.s32.totalorder %s150, 4
        %s152 = scalar_select %p151, %s150, 4
        %s153 = smul.addr %s152, 5
        %s154 = smul.addr %s153, 8
        %s155 = scalar_lea.vmem %s2, %s154
        %p156 = pneg %p72
        %p157 = pneg %p69
        %p158 = pneg %p98
        %p159 = pneg %p95
        %s160 = sand.u32 %s85, 1
        %s161 = scalar_lea.sflag [#allocation5], %s160
        %s162 = sand.u32 %s85, 1
        %s163 = smul.addr %s162, 80
        %s164 = scalar_lea.vmem [#allocation4], %s163
        %s165 = smul.u32 2, %s23
        %p166 = scmp.lt.s32.totalorder %s165, 9
        %s167 = scalar_select %p166, %s165, 9
        %s168 = smul.addr %s167, 2
        %s169 = scalar_lea.vmem %s1, %s168
        %s170 = smul.u32 2, %s23
        %s171 = sld [smem:[#allocation3 + %s23]]
        %p172 = scmp.lt.s32.totalorder %s171, 4
        %s173 = scalar_select %p172, %s171, 4
        %s174 = smul.addr %s173, 5
        %s175 = smul.addr %s174, 8
        %s176 = scalar_lea.vmem %s2, %s175
        %s177 = sld [smem:[#allocation3 + %s23]]
        %s178 = smul.u32 2, %s23
        %v179 = vld [vmem:[%s169] ss:$2 sm:$0x3]
        %s180 = scalar_lea.vmem %s169, 1
        %v181 = vld [vmem:[%s180] ss:$2 sm:$0x3]
        %v182 = vlaneseq
        %v183 = vshrl.u32 %v182, 7
        %v184 = vadd.s32 %v183, 8
        %v185 = vadd.s32 %v183, 16
        %v186 = vadd.s32 %v183, 24
        %v187 = vadd.s32 %v183, 32
        %vm188 = vcmp.lt.s32.totalorder %v183, 0
        %v189 = vsub.s32 0, %v183
        %v190 = vsel %vm188, %v189, %v183
        %v191 = vshrl.u32 %v190, 1
        %v192 = vand.u32 %v190, 1
        %v193 = vsub.s32 0, %v192
        %v194 = vsel %vm188, %v193, %v192
        %vm195 = vcmp.lt.s32.totalorder %v184, 0
        %v196 = vsub.s32 0, %v184
        %v197 = vsel %vm195, %v196, %v184
        %v198 = vshrl.u32 %v197, 1
        %v199 = vand.u32 %v197, 1
        %v200 = vsub.s32 0, %v199
        %v201 = vsel %vm195, %v200, %v199
        %vm202 = vcmp.lt.s32.totalorder %v185, 0
        %v203 = vsub.s32 0, %v185
        %v204 = vsel %vm202, %v203, %v185
        %v205 = vshrl.u32 %v204, 1
        %v206 = vand.u32 %v204, 1
        %v207 = vsub.s32 0, %v206
        %v208 = vsel %vm202, %v207, %v206
        %vm209 = vcmp.lt.s32.totalorder %v186, 0
        %v210 = vsub.s32 0, %v186
        %v211 = vsel %vm209, %v210, %v186
        %v212 = vshrl.u32 %v211, 1
        %v213 = vand.u32 %v211, 1
        %v214 = vsub.s32 0, %v213
        %v215 = vsel %vm209, %v214, %v213
        %vm216 = vcmp.lt.s32.totalorder %v187, 0
        %v217 = vsub.s32 0, %v187
        %v218 = vsel %vm216, %v217, %v187
        %v219 = vshrl.u32 %v218, 1
        %v220 = vand.u32 %v218, 1
        %v221 = vsub.s32 0, %v220
        %v222 = vsel %vm216, %v221, %v220
        %vm223 = vcmp.ne.s32.totalorder %v194, 0
        %vm224 = vcmp.ne.s32.totalorder %v201, 0
        %vm225 = vcmp.ne.s32.totalorder %v208, 0
        %vm226 = vcmp.ne.s32.totalorder %v215, 0
        %vm227 = vcmp.ne.s32.totalorder %v222, 0
        %vm228 = vcmp.lt.s32.totalorder %v194, 0
        %vm229 = vcmp.lt.s32.totalorder %v201, 0
        %vm230 = vcmp.lt.s32.totalorder %v208, 0
        %vm231 = vcmp.lt.s32.totalorder %v215, 0
        %vm232 = vcmp.lt.s32.totalorder %v222, 0
        %vm233 = vmand %vm228, %vm223
        %vm234 = vmand %vm229, %vm224
        %vm235 = vmand %vm230, %vm225
        %vm236 = vmand %vm231, %vm226
        %vm237 = vmand %vm232, %vm227
        %v238 = vadd.s32 %v194, 2
        %v239 = vadd.s32 %v201, 2
        %v240 = vadd.s32 %v208, 2
        %v241 = vadd.s32 %v215, 2
        %v242 = vadd.s32 %v222, 2
        %v243 = vsel %vm233, %v238, %v194
        %v244 = vsel %vm234, %v239, %v201
        %v245 = vsel %vm235, %v240, %v208
        %v246 = vsel %vm236, %v241, %v215
        %v247 = vsel %vm237, %v242, %v222
        %vm248 = vcmp.eq.s32.totalorder %v243, 0
        %vm249 = vcmp.eq.s32.totalorder %v244, 0
        %vm250 = vcmp.eq.s32.totalorder %v245, 0
        %vm251 = vcmp.eq.s32.totalorder %v246, 0
        %vm252 = vcmp.eq.s32.totalorder %v247, 0
        %v254 = vlaneseq
        %v255 = vshrl.u32 %v254, 7
        %v256 = vsub.s32 0, %v255
        %v257 = vrot.slane %v179, %v256
        %v258 = vlaneseq
        %v259 = vshrl.u32 %v258, 7
        %v260 = vsub.s32 1, %v259
        %v261 = vrot.slane %v179, %v260
        %v265 = vlaneseq
        %v266 = vshrl.u32 %v265, 7
        %v267 = vsub.s32 0, %v266
        %v268 = vrot.slane %v181, %v267
        %v269 = vlaneseq
        %v270 = vshrl.u32 %v269, 7
        %v271 = vsub.s32 1, %v270
        %v272 = vrot.slane %v181, %v271
        %v275 = vsel %vm248, %v257, %v268
        %v276 = vsel %vm248, %v261, %v272
        %v277 = vsel %vm249, %v257, %v268
        %v278 = vsel %vm249, %v261, %v272
        %v279 = vsel %vm250, %v257, %v268
        %v280 = vsel %vm250, %v261, %v272
        %v281 = vsel %vm251, %v257, %v268
        %v282 = vsel %vm251, %v261, %v272
        %v283 = vsel %vm252, %v257, %v268
        %v284 = vsel %vm252, %v261, %v272
        %v285 = vld [vmem:[%s176] sm:$0xff]
        %v286 = vld [vmem:[%s176 + $0x8] sm:$0xff]
        %v287 = vld [vmem:[%s176 + $0x10] sm:$0xff]
        %v288 = vld [vmem:[%s176 + $0x18] sm:$0xff]
        %v289 = vld [vmem:[%s176 + $0x20] sm:$0xf]
        %291 = vset.pattern.permute.xlu0 0
        %292 = vperm.xlu0 %291, %v285
        %v293 = vpop.permute.xlu0 %292
        %296 = vset.pattern.permute.xlu0 0
        %297 = vperm.xlu0 %296, %v286
        %v298 = vpop.permute.xlu0 %297
        %301 = vset.pattern.permute.xlu0 0
        %302 = vperm.xlu0 %301, %v287
        %v303 = vpop.permute.xlu0 %302
        %306 = vset.pattern.permute.xlu0 0
        %307 = vperm.xlu0 %306, %v288
        %v308 = vpop.permute.xlu0 %307
        %311 = vset.pattern.permute.xlu0 0
        %312 = vperm.xlu0 %311, %v289
        %v313 = vpop.permute.xlu0 %312
        %v315 = vadd.f32 %v275, %v293
        %v316 = vadd.f32 %v276, %v293
        %v317 = vadd.f32 %v277, %v298
        %v318 = vadd.f32 %v278, %v298
        %v319 = vadd.f32 %v279, %v303
        %v320 = vadd.f32 %v280, %v303
        %v321 = vadd.f32 %v281, %v308
        %v322 = vadd.f32 %v282, %v308
        %v323 = vadd.f32 %v283, %v313
        %v324 = vadd.f32 %v284, %v313
        %325 = vst [vmem:[%s164] sm:$0xff] %v315
        %326 = vst [vmem:[%s164 + $0x8] sm:$0xff] %v316
        %327 = vst [vmem:[%s164 + $0x10] sm:$0xff] %v317
        %328 = vst [vmem:[%s164 + $0x18] sm:$0xff] %v318
        %329 = vst [vmem:[%s164 + $0x20] sm:$0xff] %v319
        %330 = vst [vmem:[%s164 + $0x28] sm:$0xff] %v320
        %331 = vst [vmem:[%s164 + $0x30] sm:$0xff] %v321
        %332 = vst [vmem:[%s164 + $0x38] sm:$0xff] %v322
        %333 = vst [vmem:[%s164 + $0x40] sm:$0xf] %v323
        %334 = vst [vmem:[%s164 + $0x48] sm:$0xf] %v324
        %s335 = sand.u32 %s85, 1
        %s336 = scalar_lea.sflag [#allocation5], %s335
        %s337 = sand.u32 %s85, 1
        %s338 = smul.addr %s337, 80
        %s339 = scalar_lea.vmem [#allocation4], %s338
        // Predicated region
        $region29: #{tpu_custom_call.1} parent=27 // pred_check
          %p340 = pneg %p95
        $region30: #{tpu_custom_call.1} parent=27 // pred_check_branch
          %342 = sbr.rel (%p340) target = $region32
        $region31: #{tpu_custom_call.1} parent=27 // pred_region
          %s343 = smul.u32 2, %s23
          %s345 = ssub.s32 1280, 1280
          %346 = vsyncadd %s336, %s345
          %s347 = smul.addr %s343, 128
          %s348 = scalar_lea.hbm %s3, %s347
          %s349 = sshll.u32 %s339, 4
          %s350 = int_to_ptr.vmem [resolvable:$true] %s349
          %355 = dma.vmem_to_hbm [thread:$0]  %s350, 1280, %s348, %s336, 256, 1280, 16
        $region32: #{tpu_custom_call.1} parent=27 // pred_fallthru
          _
      $region28: #{tpu_custom_call.1} parent=5 // pred_fallthru
        _
      %p356 = scmp.le.s32.totalorder 2, %s18
      // Predicated region
      $region33: #{tpu_custom_call.1} parent=5 // pred_check
        %p357 = pneg %p356
      $region34: #{tpu_custom_call.1} parent=5 // pred_check_branch
        %359 = sbr.rel (%p357) target = $region36
      $region35: #{tpu_custom_call.1} parent=5 // pred_region
        %s360 = ssub.s32 %s18, 2
        // Predicated region
        $region37: #{tpu_custom_call.1} parent=35 // pred_check
          %p361 = pneg %p101
        $region38: #{tpu_custom_call.1} parent=35 // pred_check_branch
          %363 = sbr.rel (%p361) target = $region40
        $region39: #{tpu_custom_call.1} parent=35 // pred_region
          %s364 = sand.u32 %s86, 1
          %s365 = scalar_lea.sflag [#allocation5], %s364
          %s366 = sand.u32 %s86, 1
          %s367 = smul.addr %s366, 80
          %s368 = scalar_lea.vmem [#allocation4], %s367
          %369 = dma.done %s365, 1280
        $region40: #{tpu_custom_call.1} parent=35 // pred_fallthru
          _
      $region36: #{tpu_custom_call.1} parent=5 // pred_fallthru
        _
    $region6: #{tpu_custom_call.1} parent=1 // loop_footer
      %s22 = sadd.s32 1, %s18
    $region7: #{tpu_custom_call.1} parent=1 // loop_footer_branch
      %17 = sbr.rel target = $region3
    $region8: #{tpu_custom_call.1} parent=1 // loop_exit
      _
    %370 = vsyncpa [#allocation5], 1
    %s371 = scalar_lea.sflag [#allocation5], 1
    %372 = vsyncpa %s371, 1

</llo_original>
